<compile_context>
chip_gen: v7x
topology: tpu7x:2x2x1
jax: 0.10.0
libtpu: 0.0.40
codegen_flags: <defaults>
</compile_context>

<pallas_src>
import functools

import jax
import jax.numpy as jnp
from jax.experimental import pallas as pl
from jax.experimental.pallas import tpu as pltpu


def _round_up(a, b):
    return ((a + b - 1) // b) * b


def _sublayer_output_kernel(*refs, eps, dropout_p, use_dropout, compute_dtype):
    if use_dropout:
        x_ref, u_ref, w_ref, wb_ref, a2_ref, b2_ref, out_ref = refs
    else:
        x_ref, w_ref, wb_ref, a2_ref, b2_ref, out_ref = refs
        u_ref = None

    x = x_ref[...].astype(jnp.float32)                     # (TM, D)
    d = x.shape[-1]

    # --- LayerNorm (unbiased std, eps added to std; matches the reference module) ---
    mean = jnp.mean(x, axis=-1, keepdims=True)
    centered = x - mean
    var = jnp.sum(centered * centered, axis=-1, keepdims=True) * (1.0 / (d - 1))
    inv = 1.0 / (jnp.sqrt(var) + eps)      # f32 divide -> EUP reciprocal path on TPU
    norm = a2_ref[...].astype(jnp.float32) * (centered * inv) \
        + b2_ref[...].astype(jnp.float32)

    # --- sublayer: Linear(D, D) on the MXU: bf16 operands, f32 accumulation ---
    y = jnp.dot(norm.astype(compute_dtype), w_ref[...].astype(compute_dtype),
                preferred_element_type=jnp.float32)
    y = y + wb_ref[...].astype(jnp.float32)

    # --- inverted dropout (keep prob = 1 - p), mask streamed in as uniforms ---
    if use_dropout:
        keep = u_ref[...] >= jnp.float32(dropout_p)
        y = jnp.where(keep, y * (1.0 / (1.0 - dropout_p)), 0.0)

    # --- residual add ---
    out_ref[...] = (x + y).astype(out_ref.dtype)


def sublayer_output(x, w, wb, a2, b2, *, eps=1e-6, dropout_p=0.1, training=True,
                    rng_key=None, block_m=256, compute_dtype=jnp.bfloat16):
    B, S, D = x.shape
    M = B * S
    dropout_p = float(dropout_p)
    use_dropout = bool(training) and dropout_p > 0.0

    # p >= 1 drops the whole sublayer branch; avoid the 1/(1-p) singularity.
    if use_dropout and dropout_p >= 1.0:
        return x

    x2 = x.reshape(M, D)

    # Tile the token axis; keep the last (lane) axis whole.  D should be a multiple
    # of 128 to keep loads/stores lane-dense (the test below uses D=128).
    TM = min(int(block_m), _round_up(M, 8))
    M_pad = _round_up(M, TM)
    if M_pad != M:
        x2 = jnp.pad(x2, ((0, M_pad - M), (0, 0)))

    # bf16 weight: halves the resident VMEM footprint (v7x 64 MiB budget) and feeds
    # the MXU natively; accumulation stays f32 inside the kernel.
    w_c = w.astype(compute_dtype)
    wb2 = wb.reshape(1, D).astype(jnp.float32)
    a22 = a2.reshape(1, D).astype(jnp.float32)
    b22 = b2.reshape(1, D).astype(jnp.float32)

    row_spec = pl.BlockSpec((TM, D), lambda i: (i, 0))
    const_mat_spec = pl.BlockSpec((D, D), lambda i: (0, 0))
    const_vec_spec = pl.BlockSpec((1, D), lambda i: (0, 0))

    in_specs = [row_spec]
    operands = [x2]
    if use_dropout:
        # TODO(synk): on real TPU this could use pltpu.prng_seed/prng_random_bits
        # in-kernel (seeded per grid step); those primitives have no CPU/interpret
        # lowering, so the uniforms are drawn host-side and streamed in instead.
        if rng_key is None:
            rng_key = jax.random.PRNGKey(0)
        u = jax.random.uniform(rng_key, (M_pad, D), dtype=jnp.float32)
        in_specs.append(row_spec)
        operands.append(u)
    in_specs += [const_mat_spec, const_vec_spec, const_vec_spec, const_vec_spec]
    operands += [w_c, wb2, a22, b22]

    kernel = functools.partial(
        _sublayer_output_kernel, eps=float(eps), dropout_p=dropout_p,
        use_dropout=use_dropout, compute_dtype=compute_dtype)

    itemsize = jnp.dtype(x.dtype).itemsize
    bytes_accessed = (2 * M_pad * D * itemsize                          # x in, out
                      + D * D * jnp.dtype(compute_dtype).itemsize       # weight
                      + 3 * D * 4                                       # wb, a2, b2
                      + (M_pad * D * 4 if use_dropout else 0))          # uniforms
    cost = pl.CostEstimate(flops=2 * M_pad * D * D,
                           transcendentals=2 * M_pad,
                           bytes_accessed=int(bytes_accessed))

    out = pl.pallas_call(
        kernel,
        out_shape=jax.ShapeDtypeStruct((M_pad, D), x.dtype),
        grid=(M_pad // TM,),
        in_specs=in_specs,
        out_specs=row_spec,
        compiler_params=pltpu.CompilerParams(
            dimension_semantics=("parallel",),        # shard M tiles across TCs (v7x)
            vmem_limit_bytes=64 * 1024 * 1024),
        cost_estimate=cost,
    )(*operands)

    if M_pad != M:
        out = out[:M]
    return out.reshape(B, S, D)


def _reference_parts(x, w, wb, a2, b2, *, eps, compute_dtype):
    """Pure-JAX reference; returns (x_f32, sublayer_linear_output)."""
    xf = x.astype(jnp.float32)
    mean = jnp.mean(xf, axis=-1, keepdims=True)
    std = jnp.std(xf, axis=-1, keepdims=True, ddof=1)
    norm = a2 * (xf - mean) / (std + eps) + b2
    y = jnp.dot(norm.astype(compute_dtype), w.astype(compute_dtype),
                preferred_element_type=jnp.float32) + wb
    return xf, y


if __name__ == "__main__":
    B, S, D = 2, 8, 128        # batch=2, seq=8, hidden=128 (lane-dense last dim)
    dropout_p = 0.1
    eps = 1e-6

    key = jax.random.PRNGKey(0)
    kx, kw, kdrop = jax.random.split(key, 3)
    x = jax.random.normal(kx, (B, S, D), dtype=jnp.float32)

    a2 = jnp.ones((D,), dtype=jnp.float32)          # LayerNorm scale
    b2 = jnp.zeros((D,), dtype=jnp.float32)         # LayerNorm shift
    w = jax.random.normal(kw, (D, D), dtype=jnp.float32) * (1.0 / jnp.sqrt(D))
    wb = jnp.zeros((D,), dtype=jnp.float32)

    xf, y_ref = _reference_parts(x, w, wb, a2, b2, eps=eps,
                                 compute_dtype=jnp.bfloat16)

    # Eval mode (dropout = identity): compare against pure-JAX reference.
    out_eval = sublayer_output(x, w, wb, a2, b2, eps=eps, dropout_p=dropout_p,
                               training=False)
    out_eval = jax.block_until_ready(out_eval)
    assert out_eval.shape == (B, S, D)
    assert jnp.allclose(out_eval, xf + y_ref, atol=2e-2, rtol=2e-2), \
        "eval-mode mismatch vs reference"

    # Training mode: the dropout mask is reproducible because the same key/shape is
    # used to draw the uniforms (no padding rows for this shape).
    out_train = sublayer_output(x, w, wb, a2, b2, eps=eps, dropout_p=dropout_p,
                                training=True, rng_key=kdrop)
    out_train = jax.block_until_ready(out_train)
    u = jax.random.uniform(kdrop, (B * S, D), dtype=jnp.float32).reshape(B, S, D)
    expected_train = xf + jnp.where(u >= dropout_p, y_ref / (1.0 - dropout_p), 0.0)
    assert out_train.shape == (B, S, D)
    assert jnp.allclose(out_train, expected_train, atol=2e-2, rtol=2e-2), \
        "train-mode mismatch vs reference"

    print("KERNEL_OK")
</pallas_src>

<mosaic_0001>
module attributes {stable_mosaic.version = 11 : i64} {
  func.func @_sublayer_output_kernel(%arg0: i32, %arg1: memref<16x128xf32, #tpu.memory_space<vmem>>, %arg2: memref<128x128xbf16, #tpu.memory_space<vmem>>, %arg3: memref<1x128xf32, #tpu.memory_space<vmem>>, %arg4: memref<1x128xf32, #tpu.memory_space<vmem>>, %arg5: memref<1x128xf32, #tpu.memory_space<vmem>>, %arg6: memref<16x128xf32, #tpu.memory_space<vmem>>) attributes {dimension_semantics = [#tpu.dimension_semantics<parallel>], iteration_bounds = array<i64: 1>, scalar_prefetch = 0 : i64, scratch_operands = 0 : i64, tpu.core_type = #tpu.core_type<tc>, window_params = [{transform_indices = @transform_0, window_bounds = array<i64: 16, 128>}, {pipeline_mode = #tpu.pipeline_mode<synchronous>, transform_indices = @transform_1, window_bounds = array<i64: 128, 128>}, {pipeline_mode = #tpu.pipeline_mode<synchronous>, transform_indices = @transform_2, window_bounds = array<i64: 1, 128>}, {pipeline_mode = #tpu.pipeline_mode<synchronous>, transform_indices = @transform_3, window_bounds = array<i64: 1, 128>}, {pipeline_mode = #tpu.pipeline_mode<synchronous>, transform_indices = @transform_4, window_bounds = array<i64: 1, 128>}, {transform_indices = @transform_5, window_bounds = array<i64: 16, 128>}]} {
    %c0 = arith.constant 0 : index
    %c0_0 = arith.constant 0 : index
    %0 = vector.load %arg1[%c0, %c0_0] : memref<16x128xf32, #tpu.memory_space<vmem>>, vector<16x128xf32>
    %cst = arith.constant dense<0.000000e+00> : vector<16xf32>
    %1 = vector.multi_reduction <add>, %0, %cst [1] : vector<16x128xf32> to vector<16xf32>
    %2 = vector.shape_cast %1 : vector<16xf32> to vector<16x1xf32>
    %cst_1 = arith.constant 1.280000e+02 : f32
    %3 = vector.broadcast %cst_1 : f32 to vector<16x1xf32>
    %4 = arith.divf %2, %3 : vector<16x1xf32>
    %5 = vector.broadcast %4 : vector<16x1xf32> to vector<16x128xf32>
    %6 = arith.subf %0, %5 : vector<16x128xf32>
    %7 = arith.mulf %6, %6 : vector<16x128xf32>
    %cst_2 = arith.constant dense<0.000000e+00> : vector<16xf32>
    %8 = vector.multi_reduction <add>, %7, %cst_2 [1] : vector<16x128xf32> to vector<16xf32>
    %9 = vector.shape_cast %8 : vector<16xf32> to vector<16x1xf32>
    %cst_3 = arith.constant 0.00787401571 : f32
    %10 = vector.broadcast %cst_3 : f32 to vector<16x1xf32>
    %11 = arith.mulf %9, %10 : vector<16x1xf32>
    %12 = math.sqrt %11 : vector<16x1xf32>
    %cst_4 = arith.constant 9.99999997E-7 : f32
    %13 = vector.broadcast %cst_4 : f32 to vector<16x1xf32>
    %14 = arith.addf %12, %13 : vector<16x1xf32>
    %cst_5 = arith.constant 1.000000e+00 : f32
    %15 = vector.broadcast %cst_5 : f32 to vector<16x1xf32>
    %16 = arith.divf %15, %14 : vector<16x1xf32>
    %c0_6 = arith.constant 0 : index
    %c0_7 = arith.constant 0 : index
    %17 = vector.load %arg4[%c0_6, %c0_7] : memref<1x128xf32, #tpu.memory_space<vmem>>, vector<1x128xf32>
    %18 = vector.broadcast %16 : vector<16x1xf32> to vector<16x128xf32>
    %19 = arith.mulf %6, %18 : vector<16x128xf32>
    %20 = vector.broadcast %17 : vector<1x128xf32> to vector<16x128xf32>
    %21 = arith.mulf %20, %19 : vector<16x128xf32>
    %c0_8 = arith.constant 0 : index
    %c0_9 = arith.constant 0 : index
    %22 = vector.load %arg5[%c0_8, %c0_9] : memref<1x128xf32, #tpu.memory_space<vmem>>, vector<1x128xf32>
    %23 = vector.broadcast %22 : vector<1x128xf32> to vector<16x128xf32>
    %24 = arith.addf %21, %23 : vector<16x128xf32>
    %25 = arith.truncf %24 : vector<16x128xf32> to vector<16x128xbf16>
    %c0_10 = arith.constant 0 : index
    %c0_11 = arith.constant 0 : index
    %26 = vector.load %arg2[%c0_10, %c0_11] : memref<128x128xbf16, #tpu.memory_space<vmem>>, vector<128x128xbf16>
    %cst_12 = arith.constant dense<0.000000e+00> : vector<16x128xf32>
    %27 = tpu.matmul %25, %26, %cst_12 {dimension_numbers = #tpu.dot_dimension_numbers<[1], [0], [0], [1], [0, 0, 1, 1], [], []>} : vector<16x128xbf16>, vector<128x128xbf16>, vector<16x128xf32> -> vector<16x128xf32>
    %c0_13 = arith.constant 0 : index
    %c0_14 = arith.constant 0 : index
    %28 = vector.load %arg3[%c0_13, %c0_14] : memref<1x128xf32, #tpu.memory_space<vmem>>, vector<1x128xf32>
    %29 = vector.broadcast %28 : vector<1x128xf32> to vector<16x128xf32>
    %30 = arith.addf %27, %29 : vector<16x128xf32>
    %31 = arith.addf %0, %30 : vector<16x128xf32>
    %c0_15 = arith.constant 0 : index
    %c0_16 = arith.constant 0 : index
    %32 = vector.load %arg6[%c0_15, %c0_16] : memref<16x128xf32, #tpu.memory_space<vmem>>, vector<16x128xf32>
    tpu.vector_store %arg6[%c0_15, %c0_16], %31 {strides = array<i32>} : memref<16x128xf32, #tpu.memory_space<vmem>>, vector<16x128xf32>,
    return
  }
  func.func @transform_0(%arg0: i32) -> (i32, i32) {
    %c0_i32 = arith.constant 0 : i32
    %c0_i32_0 = arith.constant 0 : i32
    return %arg0, %c0_i32 : i32, i32
  }
  func.func @transform_1(%arg0: i32) -> (i32, i32) {
    %c0_i32 = arith.constant 0 : i32
    %c0_i32_0 = arith.constant 0 : i32
    %c0_i32_1 = arith.constant 0 : i32
    return %c0_i32, %c0_i32_0 : i32, i32
  }
  func.func @transform_2(%arg0: i32) -> (i32, i32) {
    %c0_i32 = arith.constant 0 : i32
    %c0_i32_0 = arith.constant 0 : i32
    %c0_i32_1 = arith.constant 0 : i32
    return %c0_i32, %c0_i32_0 : i32, i32
  }
  func.func @transform_3(%arg0: i32) -> (i32, i32) {
    %c0_i32 = arith.constant 0 : i32
    %c0_i32_0 = arith.constant 0 : i32
    %c0_i32_1 = arith.constant 0 : i32
    return %c0_i32, %c0_i32_0 : i32, i32
  }
  func.func @transform_4(%arg0: i32) -> (i32, i32) {
    %c0_i32 = arith.constant 0 : i32
    %c0_i32_0 = arith.constant 0 : i32
    %c0_i32_1 = arith.constant 0 : i32
    return %c0_i32, %c0_i32_0 : i32, i32
  }
  func.func @transform_5(%arg0: i32) -> (i32, i32) {
    %c0_i32 = arith.constant 0 : i32
    %c0_i32_0 = arith.constant 0 : i32
    return %arg0, %c0_i32 : i32, i32
  }
}

</mosaic_0001>

<llo_original>
// kernel: tpu_custom_call.1
$region0: #{tpu_custom_call.1}
  #allocation0 [shape = 'u32[]', space=smem, size = 0x4, offset = 0x4, fixed_abs, tag = 'smem constant byte address 0x4 - core index']
  #allocation1 [shape = 'u32[144,128]{1,0:T(1,128)}', space=vmem, size = 0x12000, scoped, tag = 'internal scratch']
  %s0 = inlined_call_operand.hbm [shape: f32[16,128], index: 0, kind: input, shape index: {}]
  %s1 = inlined_call_operand.hbm [shape: bf16[128,128], index: 1, kind: input, shape index: {}]
  %s2 = inlined_call_operand.hbm [shape: f32[1,128], index: 2, kind: input, shape index: {}]
  %s3 = inlined_call_operand.hbm [shape: f32[1,128], index: 3, kind: input, shape index: {}]
  %s4 = inlined_call_operand.hbm [shape: f32[1,128], index: 4, kind: input, shape index: {}]
  %s5 = inlined_call_operand.hbm [shape: f32[16,128], index: 5, kind: output, shape index: {}]
  %s6 = sld [smem:[#allocation0]]
  $region50: #{tpu_custom_call.1} parent=0
    _
  %s8 = ssub.s32 1, %s6
  %s9 = scalar_select 0, %s8, %s6
  $region1: #{tpu_custom_call.1} parent=0
    #allocation2 [shape = 'u8[8192]{0}', space=vmem, size = 0x2000, scoped, tag = 'input window, operand 0, single buffered']
    #allocation3 [shape = 's32[1]{0}', space=sflag, size = 0x4, scoped, tag = 'scoped memory for tpu_custom_call.1']
    #allocation4 [shape = 's32[1]{0}', space=sflag, size = 0x4, scoped, tag = 'scoped memory for tpu_custom_call.1']
    #allocation5 [shape = 'u8[32768]{0}', space=vmem, size = 0x8000, scoped, tag = 'input window, operand 1, single buffered']
    #allocation6 [shape = 's32[1]{0}', space=sflag, size = 0x4, scoped, tag = 'scoped memory for tpu_custom_call.1']
    #allocation7 [shape = 'u8[512]{0}', space=vmem, size = 0x400, scoped, tag = 'input window, operand 2, single buffered']
    #allocation8 [shape = 'u8[512]{0}', space=vmem, size = 0x400, scoped, tag = 'input window, operand 3, single buffered']
    #allocation9 [shape = 's32[1]{0}', space=sflag, size = 0x4, scoped, tag = 'scoped memory for tpu_custom_call.1']
    #allocation10 [shape = 'u8[512]{0}', space=vmem, size = 0x400, scoped, tag = 'input window, operand 4, single buffered']
    #allocation11 [shape = 'u8[8192]{0}', space=vmem, size = 0x2000, scoped, tag = 'output window, operand 0, single buffered']
    %10 = vsyncpa [#allocation3], 0
    %11 = vsyncpa [#allocation6], 0
    %12 = vsyncpa [#allocation9], 0
    %13 = vsyncpa [#allocation4], 0
    // Predicated region
    $region2: #{tpu_custom_call.1} parent=1 // pred_check
      _
    $region3: #{tpu_custom_call.1} parent=1 // pred_check_branch
      %15 = sbr.rel (0) target = $region5
    $region4: #{tpu_custom_call.1} parent=1 // pred_region
      %s17 = ssub.s32 256, 256
      %18 = vsyncadd [#allocation3], %s17
      %s19 = sshll.u32 [#allocation2], 4
      %s20 = int_to_ptr.vmem [resolvable:$true] %s19
      %25 = dma.hbm_to_vmem [thread:$0]  %s0, 256, %s20, [#allocation3], 128, 128, 8
    $region5: #{tpu_custom_call.1} parent=1 // pred_fallthru
      _
    // Predicated region
    $region6: #{tpu_custom_call.1} parent=1 // pred_check
      _
    $region7: #{tpu_custom_call.1} parent=1 // pred_check_branch
      %27 = sbr.rel (0) target = $region9
    $region8: #{tpu_custom_call.1} parent=1 // pred_region
      %s29 = ssub.s32 1024, 1024
      %30 = vsyncadd [#allocation6], %s29
      %s31 = sshll.u32 [#allocation5], 4
      %s32 = int_to_ptr.vmem [resolvable:$true] %s31
      %37 = dma.hbm_to_vmem [thread:$0]  %s1, 1024, %s32, [#allocation6], 64, 64, 4
    $region9: #{tpu_custom_call.1} parent=1 // pred_fallthru
      _
    // Predicated region
    $region10: #{tpu_custom_call.1} parent=1 // pred_check
      _
    $region11: #{tpu_custom_call.1} parent=1 // pred_check_branch
      %39 = sbr.rel (0) target = $region13
    $region12: #{tpu_custom_call.1} parent=1 // pred_region
      %s41 = ssub.s32 16, 16
      %42 = vsyncadd [#allocation6], %s41
      %s44 = sshll.u32 [#allocation7], 4
      %s45 = int_to_ptr.vmem [resolvable:$true] %s44
      %47 = dma.hbm_to_vmem [thread:$0]  %s2, 16, %s45, [#allocation6]
    $region13: #{tpu_custom_call.1} parent=1 // pred_fallthru
      _
    // Predicated region
    $region14: #{tpu_custom_call.1} parent=1 // pred_check
      _
    $region15: #{tpu_custom_call.1} parent=1 // pred_check_branch
      %49 = sbr.rel (0) target = $region17
    $region16: #{tpu_custom_call.1} parent=1 // pred_region
      %s51 = ssub.s32 16, 16
      %52 = vsyncadd [#allocation9], %s51
      %s54 = sshll.u32 [#allocation8], 4
      %s55 = int_to_ptr.vmem [resolvable:$true] %s54
      %57 = dma.hbm_to_vmem [thread:$0]  %s3, 16, %s55, [#allocation9]
    $region17: #{tpu_custom_call.1} parent=1 // pred_fallthru
      _
    // Predicated region
    $region18: #{tpu_custom_call.1} parent=1 // pred_check
      _
    $region19: #{tpu_custom_call.1} parent=1 // pred_check_branch
      %59 = sbr.rel (0) target = $region21
    $region20: #{tpu_custom_call.1} parent=1 // pred_region
      %s61 = ssub.s32 16, 16
      %62 = vsyncadd [#allocation9], %s61
      %s64 = sshll.u32 [#allocation10], 4
      %s65 = int_to_ptr.vmem [resolvable:$true] %s64
      %67 = dma.hbm_to_vmem [thread:$0]  %s4, 16, %s65, [#allocation9]
    $region21: #{tpu_custom_call.1} parent=1 // pred_fallthru
      _
    // Predicated region
    $region22: #{tpu_custom_call.1} parent=1 // pred_check
      _
    $region23: #{tpu_custom_call.1} parent=1 // pred_check_branch
      %69 = sbr.rel (0) target = $region25
    $region24: #{tpu_custom_call.1} parent=1 // pred_region
      %70 = dma.done [#allocation3], 256
    $region25: #{tpu_custom_call.1} parent=1 // pred_fallthru
      _
    // Predicated region
    $region26: #{tpu_custom_call.1} parent=1 // pred_check
      _
    $region27: #{tpu_custom_call.1} parent=1 // pred_check_branch
      %72 = sbr.rel (0) target = $region29
    $region28: #{tpu_custom_call.1} parent=1 // pred_region
      %73 = dma.done [#allocation6], 1024
    $region29: #{tpu_custom_call.1} parent=1 // pred_fallthru
      _
    // Predicated region
    $region30: #{tpu_custom_call.1} parent=1 // pred_check
      _
    $region31: #{tpu_custom_call.1} parent=1 // pred_check_branch
      %75 = sbr.rel (0) target = $region33
    $region32: #{tpu_custom_call.1} parent=1 // pred_region
      %76 = dma.done [#allocation6], 16
    $region33: #{tpu_custom_call.1} parent=1 // pred_fallthru
      _
    // Predicated region
    $region34: #{tpu_custom_call.1} parent=1 // pred_check
      _
    $region35: #{tpu_custom_call.1} parent=1 // pred_check_branch
      %78 = sbr.rel (0) target = $region37
    $region36: #{tpu_custom_call.1} parent=1 // pred_region
      %79 = dma.done [#allocation9], 16
    $region37: #{tpu_custom_call.1} parent=1 // pred_fallthru
      _
    // Predicated region
    $region38: #{tpu_custom_call.1} parent=1 // pred_check
      _
    $region39: #{tpu_custom_call.1} parent=1 // pred_check_branch
      %81 = sbr.rel (0) target = $region41
    $region40: #{tpu_custom_call.1} parent=1 // pred_region
      %82 = dma.done [#allocation9], 16
    $region41: #{tpu_custom_call.1} parent=1 // pred_fallthru
      _
    %v84 = vld [vmem:[#allocation2] sm:$0xff]
    %v85 = vld [vmem:[#allocation2 + $0x8] sm:$0xff]
    %86 = vadd.xlane.f32.xlu0 %v84
    %v87 = vpop.xlane.xlu0 %86
    %88 = vadd.xlane.f32.xlu0 %v85
    %v89 = vpop.xlane.xlu0 %88
    %v90 = vrcp.pop 128.0
    %v91 = vmul.f32 %v87, %v90
    %v92 = vmul.f32 %v89, %v90
    %v93 = vsub.f32 %v84, %v91
    %v94 = vsub.f32 %v85, %v92
    %v95 = vmul.f32 %v93, %v93
    %v96 = vmul.f32 %v94, %v94
    %97 = vadd.xlane.f32.xlu0 %v95
    %v98 = vpop.xlane.xlu0 %97
    %99 = vadd.xlane.f32.xlu0 %v96
    %v100 = vpop.xlane.xlu0 %99
    %v101 = vmul.f32 %v98, 0.007874016
    %v102 = vmul.f32 %v100, 0.007874016
    %v103 = vrsqrt.pop %v101
    %v104 = vmul.f32 %v101, %v103
    %vm105 = vcmp.eq.f32.partialorder %v101, inf
    %v106 = vsel %vm105, %v101, %v104
    %vm107 = vcmp.eq.f32.partialorder %v101, 0.0
    %v108 = vand.u32 %v101, 2147483648
    %v109 = vsel %vm107, %v108, %v106
    %v110 = vrsqrt.pop %v102
    %v111 = vmul.f32 %v102, %v110
    %vm112 = vcmp.eq.f32.partialorder %v102, inf
    %v113 = vsel %vm112, %v102, %v111
    %vm114 = vcmp.eq.f32.partialorder %v102, 0.0
    %v115 = vand.u32 %v102, 2147483648
    %v116 = vsel %vm114, %v115, %v113
    %v117 = vadd.f32 %v109, 1e-06
    %v118 = vadd.f32 %v116, 1e-06
    %v119 = vrcp.pop %v117
    %v120 = vmul.f32 1.0, %v119
    %v121 = vrcp.pop %v118
    %v122 = vmul.f32 1.0, %v121
    %v123 = vld [vmem:[#allocation8] sm:$0x1]
    %v124 = vmul.f32 %v93, %v120
    %v125 = vmul.f32 %v94, %v122
    %v127 = vlaneseq
    %v128 = vshrl.u32 %v127, 7
    %v129 = vsub.s32 0, %v128
    %v130 = vrot.slane %v123, %v129
    %v132 = vmul.f32 %v130, %v124
    %v133 = vmul.f32 %v130, %v125
    %v134 = vld [vmem:[#allocation10] sm:$0x1]
    %v136 = vlaneseq
    %v137 = vshrl.u32 %v136, 7
    %v138 = vsub.s32 0, %v137
    %v139 = vrot.slane %v134, %v138
    %v141 = vadd.f32 %v132, %v139
    %v142 = vadd.f32 %v133, %v139
    %v143 = vpack.c.bf16 %v142, %v141
    %v144 = vld [vmem:[#allocation5] sm:$0xf]
    %v145 = vld [vmem:[#allocation5 + $0x4] sm:$0xf]
    %v146 = vld [vmem:[#allocation5 + $0x8] sm:$0xf]
    %v147 = vld [vmem:[#allocation5 + $0xc] sm:$0xf]
    %v148 = vld [vmem:[#allocation5 + $0x10] sm:$0xf]
    %v149 = vld [vmem:[#allocation5 + $0x14] sm:$0xf]
    %v150 = vld [vmem:[#allocation5 + $0x18] sm:$0xf]
    %v151 = vld [vmem:[#allocation5 + $0x1c] sm:$0xf]
    %v152 = vld [vmem:[#allocation5 + $0x20] sm:$0xf]
    %v153 = vld [vmem:[#allocation5 + $0x24] sm:$0xf]
    %v154 = vld [vmem:[#allocation5 + $0x28] sm:$0xf]
    %v155 = vld [vmem:[#allocation5 + $0x2c] sm:$0xf]
    %v156 = vld [vmem:[#allocation5 + $0x30] sm:$0xf]
    %v157 = vld [vmem:[#allocation5 + $0x34] sm:$0xf]
    %v158 = vld [vmem:[#allocation5 + $0x38] sm:$0xf]
    %v159 = vld [vmem:[#allocation5 + $0x3c] sm:$0xf]
    %v160 = vld [vmem:[#allocation7] sm:$0x1]
    %v162 = vlaneseq
    %v163 = vshrl.u32 %v162, 7
    %v164 = vsub.s32 0, %v163
    %v165 = vrot.slane %v160, %v164
    %v183 = vunpack.c.l.b16 %v144
    %v184 = vunpack.c.l.b16 %v145
    %v185 = vunpack.c.l.b16 %v146
    %v186 = vunpack.c.l.b16 %v147
    %v187 = vunpack.c.l.b16 %v148
    %v188 = vunpack.c.l.b16 %v149
    %v189 = vunpack.c.l.b16 %v150
    %v190 = vunpack.c.l.b16 %v151
    %v191 = vunpack.c.l.b16 %v152
    %v192 = vunpack.c.l.b16 %v153
    %v193 = vunpack.c.l.b16 %v154
    %v194 = vunpack.c.l.b16 %v155
    %v195 = vunpack.c.l.b16 %v156
    %v196 = vunpack.c.l.b16 %v157
    %v197 = vunpack.c.l.b16 %v158
    %v198 = vunpack.c.l.b16 %v159
    %v199 = vpack.c.b16 %v184, %v183
    %v200 = vpack.c.b16 %v186, %v185
    %v201 = vpack.c.b16 %v188, %v187
    %v202 = vpack.c.b16 %v190, %v189
    %v203 = vpack.c.b16 %v192, %v191
    %v204 = vpack.c.b16 %v194, %v193
    %v205 = vpack.c.b16 %v196, %v195
    %v206 = vpack.c.b16 %v198, %v197
    %215 = vmatprep.subr.bf16.mxu0 0
    %216 = vmatpush1.bf16.msra.mxu0 %v199
    %217 = vmatprep.subr.bf16.mxu0 0
    %218 = vmatpush1.bf16.msra.mxu0 %v200
    %219 = vmatprep.subr.bf16.mxu0 0
    %220 = vmatpush1.bf16.msra.mxu0 %v201
    %221 = vmatprep.subr.bf16.mxu0 0
    %222 = vmatpush1.bf16.msra.mxu0 %v202
    %223 = vmatprep.subr.bf16.mxu0 0
    %224 = vmatpush1.bf16.msra.mxu0 %v203
    %225 = vmatprep.subr.bf16.mxu0 0
    %226 = vmatpush1.bf16.msra.mxu0 %v204
    %227 = vmatprep.subr.bf16.mxu0 0
    %228 = vmatpush1.bf16.msra.mxu0 %v205
    %229 = vmatprep.subr.bf16.mxu0 0
    %230 = vmatpush1.bf16.msra.mxu0 %v206
    %231 = vmatprep.subr.bf16.mxu0 0
    %232 = vmatpush1.bf16.msra.mxu0 0
    %233 = vmatprep.subr.bf16.mxu0 0
    %234 = vmatpush1.bf16.msra.mxu0 0
    %235 = vmatprep.subr.bf16.mxu0 0
    %236 = vmatpush1.bf16.msra.mxu0 0
    %237 = vmatprep.subr.bf16.mxu0 0
    %238 = vmatpush1.bf16.msra.mxu0 0
    %239 = vmatprep.subr.bf16.mxu0 0
    %240 = vmatpush1.bf16.msra.mxu0 0
    %241 = vmatprep.subr.bf16.mxu0 0
    %242 = vmatpush1.bf16.msra.mxu0 0
    %243 = vmatprep.subr.bf16.mxu0 0
    %244 = vmatpush1.bf16.msra.mxu0 0
    %245 = vmatprep.subr.bf16.mxu0 0
    %246 = vmatpush1.bf16.msra.mxu0 0
    %247 = vmatprep.mubr.bf16.mxu0 0
    %248 = vmatmul.mubr.bf16.gmra.mrb[0].mxu0 %v143
    %v249 = vpop.f32.mrb[0].mxu0
    %v250 = vadd.f32 %v165, %v249
    %v251 = vpop.f32.mrb[0].mxu0
    %v252 = vpop.f32.mrb[0].mxu0
    %v253 = vadd.f32 %v165, %v252
    %v254 = vpop.f32.mrb[0].mxu0
    %255 = vdwg.mxu0
    %v256 = vadd.f32 %v84, %v250
    %v257 = vadd.f32 %v85, %v253
    %258 = vst [vmem:[#allocation11] sm:$0xff] %v256
    %259 = vst [vmem:[#allocation11 + $0x8] sm:$0xff] %v257
    // Predicated region
    $region42: #{tpu_custom_call.1} parent=1 // pred_check
      _
    $region43: #{tpu_custom_call.1} parent=1 // pred_check_branch
      %261 = sbr.rel (0) target = $region45
    $region44: #{tpu_custom_call.1} parent=1 // pred_region
      %s263 = ssub.s32 256, 256
      %264 = vsyncadd [#allocation4], %s263
      %s265 = sshll.u32 [#allocation11], 4
      %s266 = int_to_ptr.vmem [resolvable:$true] %s265
      %271 = dma.vmem_to_hbm [thread:$0]  %s266, 256, %s5, [#allocation4], 128, 128, 8
    $region45: #{tpu_custom_call.1} parent=1 // pred_fallthru
      _
    // Predicated region
    $region46: #{tpu_custom_call.1} parent=1 // pred_check
      _
    $region47: #{tpu_custom_call.1} parent=1 // pred_check_branch
      %273 = sbr.rel (0) target = $region49
    $region48: #{tpu_custom_call.1} parent=1 // pred_region
      %274 = dma.done [#allocation4], 256
    $region49: #{tpu_custom_call.1} parent=1 // pred_fallthru
      _
    %275 = vsyncpa [#allocation3], 1
    %276 = vsyncpa [#allocation6], 1
    %277 = vsyncpa [#allocation9], 1
    %278 = vsyncpa [#allocation4], 1

</llo_original>
